<compile_context>
chip_gen: v7x
topology: tpu7x:2x2x1
jax: 0.10.0
libtpu: 0.0.40
codegen_flags: <defaults>
</compile_context>

<pallas_src>
import functools

import jax
import jax.numpy as jnp
from jax.experimental import pallas as pl
from jax.experimental.pallas import tpu as pltpu


def _se_kernel(x_ref, w1t_ref, w2t_ref, o_ref, *, spatial_axis):
    # x_ref / o_ref : (TB, C, HW) if spatial_axis == 2, else (TB, HW, C)
    # w1t_ref       : (C, hid)  f32, pre-scaled by 1/HW (mean folded into weight)
    # w2t_ref       : (hid, C)  f32

    # Squeeze: global sum-pool over the spatial axis with an f32 accumulator.
    # Using dtype= on the reduce avoids materializing a full f32 copy of the
    # (possibly bf16) input slab.
    pooled = jnp.sum(x_ref[...], axis=spatial_axis, dtype=jnp.float32)  # (TB, C)

    # Excitation MLP: Linear -> ReLU -> Linear -> Sigmoid (bias-free).  hid is
    # tiny (C/r); this MXU work is hidden under the HBM-bound streaming.
    h = jnp.dot(pooled, w1t_ref[...], preferred_element_type=jnp.float32)   # (TB, hid)
    h = jnp.maximum(h, 0.0)
    y = jnp.dot(h, w2t_ref[...], preferred_element_type=jnp.float32)        # (TB, C)
    y = jax.nn.sigmoid(y)

    # Scale: gate in the native dtype so the big slab never exists in f32
    # (matches PyTorch low-precision behavior for bf16/fp16 inputs).
    y = y.astype(o_ref.dtype)
    if spatial_axis == 2:                       # channels-first (TB, C, HW)
        o_ref[...] = x_ref[...] * y[:, :, None]
    else:                                       # channels-last (TB, HW, C)
        o_ref[...] = x_ref[...] * y[:, None, :]


def _vmem_capacity_bytes():
    """Trace-time VMEM capacity query with a conservative (v7x) fallback.

    With the ~4 MiB tile target below, a conservative fallback only affects
    the vmem_limit cap, not tile sizes.
    """
    # TODO(synk): verify get_tpu_info() reports per-TensorCore (64 MiB) VMEM on
    # v7x rather than per-chip; the 7/8 cap below assumes per-core numbers.
    try:
        return int(pltpu.get_tpu_info().vmem_capacity_bytes)
    except Exception:
        return 64 << 20


def _cdiv(a, b):
    return -(-a // b)


def _pick_batch_tile(B, per_batch_bytes, vmem_cap):
    """Batch tile TB: ~4 MiB slabs, fits 0.35*VMEM double-buffered, >= 4 steps."""
    # VMEM cap: 2 buffers x (in slab + out slab) must fit well under capacity,
    # leaving room for the reduce temporaries, weights and compiler scratch.
    budget = int(vmem_cap * 0.35)
    tb_vmem = max(1, budget // max(4 * per_batch_bytes, 1))
    # DMA-efficiency target: ~4 MiB input slabs (past the ~512-row plateau).
    tb_dma = max(1, (4 << 20) // max(per_batch_bytes, 1))
    tb = max(1, min(tb_vmem, tb_dma, B))

    # Pipeline / megacore target: >= 4 grid steps (or as many as B allows) so
    # the next input DMA overlaps the previous output writeback and both v7x
    # TensorCores get >= 2 steps.  Cheap (~0.35 us/step) on 1-TC parts.
    min_steps = 4 if B >= 4 else B
    if min_steps > 0:
        tb = min(tb, max(1, _cdiv(B, min_steps)))

    # Prefer an even step count so neither v7x core idles on a tail step; never
    # shrink the tile by more than 2x for this.
    steps = _cdiv(B, tb)
    if steps % 2 == 1 and B > tb:
        for t in range(tb, max(1, tb // 2) - 1, -1):
            if _cdiv(B, t) % 2 == 0:
                tb = t
                break
    return tb


def _lane_util(n):
    """Fraction of 128-lane vregs actually used when n sits on the lane axis."""
    return n / (128.0 * _cdiv(n, 128))


@jax.jit
def se_attention(x, w1, w2):
    """x: (B, C, H, W); w1: (C//r, C); w2: (C, C//r)  (PyTorch Linear layout)."""
    B, C, H, W = x.shape
    HW = H * W
    hid = w1.shape[0]

    # Fold the 1/HW mean normalisation into the transposed fc1 weight so the
    # kernel only needs a sum-pool.
    w1t = jnp.transpose(w1).astype(jnp.float32) * (1.0 / HW)   # (C, hid)
    w2t = jnp.transpose(w2).astype(jnp.float32)                # (hid, C)

    # Layout: put whichever of HW / C wastes fewer lanes on the lane axis.
    # Ties go to channels-first (no wrapper transpose needed).
    channels_last = _lane_util(C) > _lane_util(HW)
    if channels_last:
        x_slab = jnp.transpose(x, (0, 2, 3, 1)).reshape(B, HW, C)
        slab_dims = (HW, C)
        spatial_axis = 1
    else:
        x_slab = x.reshape(B, C, HW)
        slab_dims = (C, HW)
        spatial_axis = 2

    itemsize = jnp.dtype(x.dtype).itemsize
    per_batch = C * HW * itemsize
    vmem_cap = _vmem_capacity_bytes()
    tb = _pick_batch_tile(B, per_batch, vmem_cap)
    grid = (pl.cdiv(B, tb),)   # partial last block allowed (writes are masked)

    # VMEM limit: double-buffered in+out slabs + weights + compiler scratch,
    # capped at 7/8 of physical capacity (~56 MiB v7x, ~112 MiB v5e/v6e).
    block_bytes = tb * per_batch
    w_bytes = 2 * (C * hid + hid * C) * 4
    needed = 4 * block_bytes + w_bytes + (4 << 20)
    vmem_limit = int(min((vmem_cap * 7) // 8, max(needed, 32 << 20)))

    # Advisory cost estimate: memory-bound streaming op.
    cost = pl.CostEstimate(
        flops=int(4 * B * C * hid + 2 * B * C * HW),
        transcendentals=int(B * C),
        bytes_accessed=int(2 * B * C * HW * itemsize + w_bytes),
    )

    # TODO(synk): if a single-batch slab (C*HW) ever exceeds the VMEM budget,
    # fall back to a two-phase (pool pass + gate pass) spatial tiling; the
    # single-pass fused version here is the fast path for SE-sized maps.
    # TODO(synk): optionally pipeline_mode=pl.Buffered(3) on the x input for
    # v5e's slower HBM once chip-generation detection is plumbed through.
    out_slab = pl.pallas_call(
        functools.partial(_se_kernel, spatial_axis=spatial_axis),
        out_shape=jax.ShapeDtypeStruct((B,) + slab_dims, x.dtype),
        grid_spec=pltpu.PrefetchScalarGridSpec(
            num_scalar_prefetch=0,
            grid=grid,
            in_specs=[
                pl.BlockSpec((tb,) + slab_dims, lambda b: (b, 0, 0)),
                pl.BlockSpec((C, hid), lambda b: (0, 0)),
                pl.BlockSpec((hid, C), lambda b: (0, 0)),
            ],
            out_specs=pl.BlockSpec((tb,) + slab_dims, lambda b: (b, 0, 0)),
        ),
        compiler_params=pltpu.CompilerParams(
            dimension_semantics=("parallel",),
            vmem_limit_bytes=vmem_limit,
        ),
        cost_estimate=cost,
    )(x_slab, w1t, w2t)

    if channels_last:
        return jnp.transpose(out_slab.reshape(B, H, W, C), (0, 3, 1, 2))
    return out_slab.reshape(B, C, H, W)


def se_attention_ref(x, w1, w2):
    """Pure-JAX reference mirroring the PyTorch forward."""
    pooled = jnp.mean(x, axis=(2, 3))                 # (B, C)
    h = jnp.maximum(pooled @ w1.T, 0.0)               # (B, C//r)
    y = jax.nn.sigmoid(h @ w2.T)                      # (B, C)
    return x * y[:, :, None, None]


if __name__ == "__main__":
    key = jax.random.PRNGKey(0)
    kx, k1, k2 = jax.random.split(key, 3)

    # Small shapes consistent with the module: channel=64, reduction=16.
    B, C, H, W = 2, 64, 16, 16
    reduction = 16
    hid = C // reduction

    x = jax.random.normal(kx, (B, C, H, W), dtype=jnp.float32)
    # Deterministic synthetic Linear weights (std=0.001 like init_weights).
    w1 = 0.001 * jax.random.normal(k1, (hid, C), dtype=jnp.float32)  # fc1 weight
    w2 = 0.001 * jax.random.normal(k2, (C, hid), dtype=jnp.float32)  # fc2 weight

    out = se_attention(x, w1, w2)
    out = jax.block_until_ready(out)

    ref = se_attention_ref(x, w1, w2)
    assert out.shape == (B, C, H, W)
    assert jnp.allclose(out, ref, atol=1e-5, rtol=1e-5), "mismatch vs reference"

    print("KERNEL_OK")
</pallas_src>

<mosaic_0001>
module attributes {stable_mosaic.version = 11 : i64} {
  func.func @_se_kernel(%arg0: i32, %arg1: memref<1x64x256xf32, #tpu.memory_space<vmem>>, %arg2: memref<64x4xf32, #tpu.memory_space<vmem>>, %arg3: memref<4x64xf32, #tpu.memory_space<vmem>>, %arg4: memref<1x64x256xf32, #tpu.memory_space<vmem>>) attributes {dimension_semantics = [#tpu.dimension_semantics<parallel>], iteration_bounds = array<i64: 2>, scalar_prefetch = 0 : i64, scratch_operands = 0 : i64, tpu.core_type = #tpu.core_type<tc>, window_params = [{transform_indices = @transform_0, window_bounds = array<i64: 1, 64, 256>}, {pipeline_mode = #tpu.pipeline_mode<synchronous>, transform_indices = @transform_1, window_bounds = array<i64: 64, 4>}, {pipeline_mode = #tpu.pipeline_mode<synchronous>, transform_indices = @transform_2, window_bounds = array<i64: 4, 64>}, {transform_indices = @transform_3, window_bounds = array<i64: 1, 64, 256>}]} {
    %c0 = arith.constant 0 : index
    %c0_0 = arith.constant 0 : index
    %c0_1 = arith.constant 0 : index
    %0 = vector.load %arg1[%c0, %c0_0, %c0_1] : memref<1x64x256xf32, #tpu.memory_space<vmem>>, vector<1x64x256xf32>
    %cst = arith.constant dense<0.000000e+00> : vector<1x64xf32>
    %1 = vector.multi_reduction <add>, %0, %cst [2] : vector<1x64x256xf32> to vector<1x64xf32>
    %c0_2 = arith.constant 0 : index
    %c0_3 = arith.constant 0 : index
    %2 = vector.load %arg2[%c0_2, %c0_3] : memref<64x4xf32, #tpu.memory_space<vmem>>, vector<64x4xf32>
    %cst_4 = arith.constant dense<0.000000e+00> : vector<1x4xf32>
    %3 = tpu.matmul %1, %2, %cst_4 {dimension_numbers = #tpu.dot_dimension_numbers<[1], [0], [0], [1], [0, 0, 1, 1], [], []>} : vector<1x64xf32>, vector<64x4xf32>, vector<1x4xf32> -> vector<1x4xf32>
    %cst_5 = arith.constant 0.000000e+00 : f32
    %4 = vector.broadcast %cst_5 : f32 to vector<1x4xf32>
    %5 = arith.maximumf %3, %4 : vector<1x4xf32>
    %c0_6 = arith.constant 0 : index
    %c0_7 = arith.constant 0 : index
    %6 = vector.load %arg3[%c0_6, %c0_7] : memref<4x64xf32, #tpu.memory_space<vmem>>, vector<4x64xf32>
    %cst_8 = arith.constant dense<0.000000e+00> : vector<1x64xf32>
    %7 = tpu.matmul %5, %6, %cst_8 {dimension_numbers = #tpu.dot_dimension_numbers<[1], [0], [0], [1], [0, 0, 1, 1], [], []>} : vector<1x4xf32>, vector<4x64xf32>, vector<1x64xf32> -> vector<1x64xf32>
    %8 = arith.negf %7 : vector<1x64xf32>
    %9 = math.exp %8 : vector<1x64xf32>
    %cst_9 = arith.constant 1.000000e+00 : f32
    %10 = vector.broadcast %cst_9 : f32 to vector<1x64xf32>
    %11 = arith.addf %10, %9 : vector<1x64xf32>
    %12 = arith.divf %10, %11 : vector<1x64xf32>
    %c0_10 = arith.constant 0 : index
    %c0_11 = arith.constant 0 : index
    %c0_12 = arith.constant 0 : index
    %13 = vector.load %arg1[%c0_10, %c0_11, %c0_12] : memref<1x64x256xf32, #tpu.memory_space<vmem>>, vector<1x64x256xf32>
    %14 = vector.shape_cast %12 : vector<1x64xf32> to vector<1x64x1xf32>
    %15 = vector.broadcast %14 : vector<1x64x1xf32> to vector<1x64x256xf32>
    %16 = arith.mulf %13, %15 : vector<1x64x256xf32>
    %c0_13 = arith.constant 0 : index
    %c0_14 = arith.constant 0 : index
    %c0_15 = arith.constant 0 : index
    %17 = vector.load %arg4[%c0_13, %c0_14, %c0_15] : memref<1x64x256xf32, #tpu.memory_space<vmem>>, vector<1x64x256xf32>
    tpu.vector_store %arg4[%c0_13, %c0_14, %c0_15], %16 {strides = array<i32>} : memref<1x64x256xf32, #tpu.memory_space<vmem>>, vector<1x64x256xf32>,
    return
  }
  func.func @transform_0(%arg0: i32) -> (i32, i32, i32) {
    %c0_i32 = arith.constant 0 : i32
    %c0_i32_0 = arith.constant 0 : i32
    %c0_i32_1 = arith.constant 0 : i32
    return %arg0, %c0_i32, %c0_i32_0 : i32, i32, i32
  }
  func.func @transform_1(%arg0: i32) -> (i32, i32) {
    %c0_i32 = arith.constant 0 : i32
    %c0_i32_0 = arith.constant 0 : i32
    %c0_i32_1 = arith.constant 0 : i32
    return %c0_i32, %c0_i32_0 : i32, i32
  }
  func.func @transform_2(%arg0: i32) -> (i32, i32) {
    %c0_i32 = arith.constant 0 : i32
    %c0_i32_0 = arith.constant 0 : i32
    %c0_i32_1 = arith.constant 0 : i32
    return %c0_i32, %c0_i32_0 : i32, i32
  }
  func.func @transform_3(%arg0: i32) -> (i32, i32, i32) {
    %c0_i32 = arith.constant 0 : i32
    %c0_i32_0 = arith.constant 0 : i32
    %c0_i32_1 = arith.constant 0 : i32
    return %arg0, %c0_i32, %c0_i32_0 : i32, i32, i32
  }
}

</mosaic_0001>

<llo_original>
// kernel: se_attention.1
$region0: #{se_attention.1}
  #allocation0 [shape = 'u32[]', space=smem, size = 0x4, offset = 0x4, fixed_abs, tag = 'smem constant byte address 0x4 - core index']
  #allocation1 [shape = 'u32[144,128]{1,0:T(1,128)}', space=vmem, size = 0x12000, scoped, tag = 'internal scratch']
  %s0 = inlined_call_operand.vmem [shape: f32[2,64,256], index: 0, kind: input, shape index: {}]
  %s1 = inlined_call_operand.vmem [shape: f32[64,4], index: 1, kind: input, shape index: {}]
  %s2 = inlined_call_operand.vmem [shape: f32[4,64], index: 2, kind: input, shape index: {}]
  %s3 = inlined_call_operand.vmem [shape: f32[2,64,256], index: 3, kind: output, shape index: {}]
  %s4 = sld [smem:[#allocation0]]
  $region45: #{se_attention.1} parent=0
    _
  %s6 = ssub.s32 1, %s4
  %s7 = scalar_select 0, %s6, %s4
  loop: start=0, step=1, limit=4
  $region2: #{se_attention.1} parent=0 // loop_pre_header
    _
  $region3: #{se_attention.1} parent=0 // loop_header
    %s9 = sphi 0, %s13
    %p10 = scmp.ge.s32.totalorder %s9, 4
    %s19 = sphi 0, %s21
    %s22 = sphi 0, %s19
    %s23 = sphi 0, %s22
    %s39 = sphi 0, %s23
    %s43 = sphi 0, %s43
    %s45 = sphi 0, %s43
    %s46 = sphi 0, %s45
    %s60 = sphi 0, %s46
    %s64 = sphi 0, %s64
    %s66 = sphi 0, %s64
    %s67 = sphi 0, %s66
    %s81 = sphi 0, %s67
    %s87 = sphi 0, %s89
    %s90 = sphi 0, %s87
    %s91 = sphi 0, %s90
    %s107 = sphi 0, %s91
  $region4: #{se_attention.1} parent=0 // loop_header_branch
    %12 = sbr.rel (%p10) target = $region8
  $region5: #{se_attention.1} parent=0 // loop_body
    %s14 = ssub.s32 %s9, 1
    %s15 = ssub.s32 %s9, 2
    %s16 = sadd.s32 %s9, 1
    %s17 = ssub.s32 %s9, %s16
    %p18 = scmp.eq.s32.totalorder %s17, 0
    %s20 = sadd.s32 %s19, 1
    %s21 = scalar_select %p18, %s19, %s20
    %p24 = pneg %p18
    %p25 = scmp.eq.s32.totalorder %s9, 1
    %p26 = por %p24, %p25
    %p27 = scmp.ne.s32.totalorder %s19, %s22
    %p28 = scmp.eq.s32.totalorder %s9, 0
    %p29 = por %p27, %p28
    %p30 = scmp.ne.s32.totalorder %s19, %s22
    %p31 = scmp.eq.s32.totalorder %s14, 1
    %p32 = por %p30, %p31
    %p33 = scmp.ne.s32.totalorder %s22, %s23
    %p34 = scmp.eq.s32.totalorder %s14, 0
    %p35 = por %p33, %p34
    %p36 = scmp.ne.s32.totalorder %s22, %s23
    %p37 = scmp.eq.s32.totalorder %s15, 1
    %p38 = por %p36, %p37
    %p40 = scmp.ne.s32.totalorder %s23, %s39
    %p41 = scmp.eq.s32.totalorder %s15, 0
    %p42 = por %p40, %p41
    %s44 = sadd.s32 %s43, 1
    %p47 = scmp.eq.s32.totalorder %s9, 1
    %p48 = scmp.ne.s32.totalorder %s43, %s45
    %p49 = scmp.eq.s32.totalorder %s9, 0
    %p50 = por %p48, %p49
    %p51 = scmp.ne.s32.totalorder %s43, %s45
    %p52 = scmp.eq.s32.totalorder %s14, 1
    %p53 = por %p51, %p52
    %p54 = scmp.ne.s32.totalorder %s45, %s46
    %p55 = scmp.eq.s32.totalorder %s14, 0
    %p56 = por %p54, %p55
    %p57 = scmp.ne.s32.totalorder %s45, %s46
    %p58 = scmp.eq.s32.totalorder %s15, 1
    %p59 = por %p57, %p58
    %p61 = scmp.ne.s32.totalorder %s46, %s60
    %p62 = scmp.eq.s32.totalorder %s15, 0
    %p63 = por %p61, %p62
    %s65 = sadd.s32 %s64, 1
    %p68 = scmp.eq.s32.totalorder %s9, 1
    %p69 = scmp.ne.s32.totalorder %s64, %s66
    %p70 = scmp.eq.s32.totalorder %s9, 0
    %p71 = por %p69, %p70
    %p72 = scmp.ne.s32.totalorder %s64, %s66
    %p73 = scmp.eq.s32.totalorder %s14, 1
    %p74 = por %p72, %p73
    %p75 = scmp.ne.s32.totalorder %s66, %s67
    %p76 = scmp.eq.s32.totalorder %s14, 0
    %p77 = por %p75, %p76
    %p78 = scmp.ne.s32.totalorder %s66, %s67
    %p79 = scmp.eq.s32.totalorder %s15, 1
    %p80 = por %p78, %p79
    %p82 = scmp.ne.s32.totalorder %s67, %s81
    %p83 = scmp.eq.s32.totalorder %s15, 0
    %p84 = por %p82, %p83
    %s85 = ssub.s32 %s9, %s16
    %p86 = scmp.eq.s32.totalorder %s85, 0
    %s88 = sadd.s32 %s87, 1
    %s89 = scalar_select %p86, %s87, %s88
    %p92 = pneg %p86
    %p93 = scmp.eq.s32.totalorder %s9, 1
    %p94 = por %p92, %p93
    %p95 = scmp.ne.s32.totalorder %s87, %s90
    %p96 = scmp.eq.s32.totalorder %s9, 0
    %p97 = por %p95, %p96
    %p98 = scmp.ne.s32.totalorder %s87, %s90
    %p99 = scmp.eq.s32.totalorder %s14, 1
    %p100 = por %p98, %p99
    %p101 = scmp.ne.s32.totalorder %s90, %s91
    %p102 = scmp.eq.s32.totalorder %s14, 0
    %p103 = por %p101, %p102
    %p104 = scmp.ne.s32.totalorder %s90, %s91
    %p105 = scmp.eq.s32.totalorder %s15, 1
    %p106 = por %p104, %p105
    %p108 = scmp.ne.s32.totalorder %s91, %s107
    %p109 = scmp.eq.s32.totalorder %s15, 0
    %p110 = por %p108, %p109
    %p111 = scmp.le.s32.totalorder 1, %s9
    %p112 = scmp.lt.s32.totalorder %s9, 3
    %p113 = pnand %p111, %p112
    %p114 = pneg %p113
    // Predicated region
    $region9: #{se_attention.1} parent=5 // pred_check
      _
    $region10: #{se_attention.1} parent=5 // pred_check_branch
      %116 = sbr.rel (%p113) target = $region12
    $region11: #{se_attention.1} parent=5 // pred_region
      %s117 = ssub.s32 %s9, 1
      // Predicated region
      $region13: #{se_attention.1} parent=11 // pred_check
        %p118 = pneg %p56
      $region14: #{se_attention.1} parent=11 // pred_check_branch
        %120 = sbr.rel (%p118) target = $region16
      $region15: #{se_attention.1} parent=11 // pred_region
        _
      $region16: #{se_attention.1} parent=11 // pred_fallthru
        _
      // Predicated region
      $region17: #{se_attention.1} parent=11 // pred_check
        %p121 = pneg %p77
      $region18: #{se_attention.1} parent=11 // pred_check_branch
        %123 = sbr.rel (%p121) target = $region20
      $region19: #{se_attention.1} parent=11 // pred_region
        _
      $region20: #{se_attention.1} parent=11 // pred_fallthru
        _
    $region12: #{se_attention.1} parent=5 // pred_fallthru
      _
    %p124 = scmp.lt.s32.totalorder %s9, 2
    // Predicated region
    $region21: #{se_attention.1} parent=5 // pred_check
      %p125 = pneg %p124
    $region22: #{se_attention.1} parent=5 // pred_check_branch
      %127 = sbr.rel (%p125) target = $region24
    $region23: #{se_attention.1} parent=5 // pred_region
      // Predicated region
      $region25: #{se_attention.1} parent=23 // pred_check
        %p128 = pneg %p29
      $region26: #{se_attention.1} parent=23 // pred_check_branch
        %130 = sbr.rel (%p128) target = $region28
      $region27: #{se_attention.1} parent=23 // pred_region
        %p131 = scmp.lt.s32.totalorder %s9, 1
        %s132 = scalar_select %p131, %s9, 1
        %s133 = smul.addr %s132, 16
        %s134 = smul.addr %s133, 8
        %s135 = scalar_lea.vmem %s0, %s134
      $region28: #{se_attention.1} parent=23 // pred_fallthru
        _
    $region24: #{se_attention.1} parent=5 // pred_fallthru
      _
    %p136 = scmp.le.s32.totalorder 1, %s9
    %p137 = scmp.lt.s32.totalorder %s9, 3
    %p138 = pnand %p136, %p137
    %p139 = pneg %p138
    // Predicated region
    $region29: #{se_attention.1} parent=5 // pred_check
      _
    $region30: #{se_attention.1} parent=5 // pred_check_branch
      %141 = sbr.rel (%p138) target = $region32
    $region31: #{se_attention.1} parent=5 // pred_region
      %s142 = ssub.s32 %s9, 1
      %p143 = scmp.lt.s32.totalorder %s14, 1
      %s144 = scalar_select %p143, %s14, 1
      %s145 = smul.addr %s144, 16
      %s146 = smul.addr %s145, 8
      %s147 = scalar_lea.vmem %s0, %s146
      %p148 = pneg %p35
      %p149 = pneg %p32
      %p150 = pneg %p56
      %p151 = pneg %p53
      %p152 = pneg %p77
      %p153 = pneg %p74
      %p154 = pneg %p103
      %p155 = pneg %p100
      %p156 = scmp.lt.s32.totalorder %s14, 1
      %s157 = scalar_select %p156, %s14, 1
      %s158 = smul.addr %s157, 16
      %s159 = smul.addr %s158, 8
      %s160 = scalar_lea.vmem %s3, %s159
      %p161 = scmp.lt.s32.totalorder %s14, 1
      %s162 = scalar_select %p161, %s14, 1
      %s163 = smul.addr %s162, 16
      %s164 = smul.addr %s163, 8
      %s165 = scalar_lea.vmem %s0, %s164
      %p166 = scmp.lt.s32.totalorder %s14, 1
      %s167 = scalar_select %p166, %s14, 1
      %s168 = smul.addr %s167, 16
      %s169 = smul.addr %s168, 8
      %s170 = scalar_lea.vmem %s3, %s169
      %v171 = vld [vmem:[%s165] sm:$0xff]
      %v172 = vld [vmem:[%s165 + $0x8] sm:$0xff]
      %v173 = vld [vmem:[%s165 + $0x10] sm:$0xff]
      %v174 = vld [vmem:[%s165 + $0x18] sm:$0xff]
      %v175 = vld [vmem:[%s165 + $0x20] sm:$0xff]
      %v176 = vld [vmem:[%s165 + $0x28] sm:$0xff]
      %v177 = vld [vmem:[%s165 + $0x30] sm:$0xff]
      %v178 = vld [vmem:[%s165 + $0x38] sm:$0xff]
      %v179 = vld [vmem:[%s165 + $0x40] sm:$0xff]
      %v180 = vld [vmem:[%s165 + $0x48] sm:$0xff]
      %v181 = vld [vmem:[%s165 + $0x50] sm:$0xff]
      %v182 = vld [vmem:[%s165 + $0x58] sm:$0xff]
      %v183 = vld [vmem:[%s165 + $0x60] sm:$0xff]
      %v184 = vld [vmem:[%s165 + $0x68] sm:$0xff]
      %v185 = vld [vmem:[%s165 + $0x70] sm:$0xff]
      %v186 = vld [vmem:[%s165 + $0x78] sm:$0xff]
      %v187 = vadd.f32 %v171, %v172
      %188 = vadd.xlane.f32.xlu0 %v187
      %v189 = vpop.xlane.xlu0 %188
      %v190 = vadd.f32 %v173, %v174
      %191 = vadd.xlane.f32.xlu0 %v190
      %v192 = vpop.xlane.xlu0 %191
      %v193 = vadd.f32 %v175, %v176
      %194 = vadd.xlane.f32.xlu0 %v193
      %v195 = vpop.xlane.xlu0 %194
      %v196 = vadd.f32 %v177, %v178
      %197 = vadd.xlane.f32.xlu0 %v196
      %v198 = vpop.xlane.xlu0 %197
      %v199 = vadd.f32 %v179, %v180
      %200 = vadd.xlane.f32.xlu0 %v199
      %v201 = vpop.xlane.xlu0 %200
      %v202 = vadd.f32 %v181, %v182
      %203 = vadd.xlane.f32.xlu0 %v202
      %v204 = vpop.xlane.xlu0 %203
      %v205 = vadd.f32 %v183, %v184
      %206 = vadd.xlane.f32.xlu0 %v205
      %v207 = vpop.xlane.xlu0 %206
      %v208 = vadd.f32 %v185, %v186
      %209 = vadd.xlane.f32.xlu0 %v208
      %v210 = vpop.xlane.xlu0 %209
      %v211 = vld [vmem:[%s1] sm:$0xff]
      %v212 = vld [vmem:[%s1 + $0x8] sm:$0xff]
      %v213 = vld [vmem:[%s1 + $0x10] sm:$0xff]
      %v214 = vld [vmem:[%s1 + $0x18] sm:$0xff]
      %v215 = vld [vmem:[%s1 + $0x20] sm:$0xff]
      %v216 = vld [vmem:[%s1 + $0x28] sm:$0xff]
      %v217 = vld [vmem:[%s1 + $0x30] sm:$0xff]
      %v218 = vld [vmem:[%s1 + $0x38] sm:$0xff]
      %v227 = vlaneseq
      %v228 = vand.u32 %v227, 127
      %v229 = vlaneseq
      %v230 = vshrl.u32 %v229, 7
      %v231 = vsub.s32 %v228, %v230
      %v232 = vrot.slane %v189, %v231
      %v233 = vadd.s32 %v228, 4294967288
      %v234 = vlaneseq
      %v235 = vshrl.u32 %v234, 7
      %v236 = vsub.s32 %v233, %v235
      %v237 = vrot.slane %v192, %v236
      %vm238 = vcmask 130112
      %v239 = vsel %vm238, %v237, %v232
      %v240 = vadd.s32 %v228, 4294967280
      %v241 = vlaneseq
      %v242 = vshrl.u32 %v241, 7
      %v243 = vsub.s32 %v240, %v242
      %v244 = vrot.slane %v195, %v243
      %vm245 = vcmask 195712
      %v246 = vsel %vm245, %v244, %v239
      %v247 = vadd.s32 %v228, 4294967272
      %v248 = vlaneseq
      %v249 = vshrl.u32 %v248, 7
      %v250 = vsub.s32 %v247, %v249
      %v251 = vrot.slane %v198, %v250
      %vm252 = vcmask 261312
      %v253 = vsel %vm252, %v251, %v246
      %v254 = vadd.s32 %v228, 4294967264
      %v255 = vlaneseq
      %v256 = vshrl.u32 %v255, 7
      %v257 = vsub.s32 %v254, %v256
      %v258 = vrot.slane %v201, %v257
      %vm259 = vcmask 326912
      %v260 = vsel %vm259, %v258, %v253
      %v261 = vadd.s32 %v228, 4294967256
      %v262 = vlaneseq
      %v263 = vshrl.u32 %v262, 7
      %v264 = vsub.s32 %v261, %v263
      %v265 = vrot.slane %v204, %v264
      %vm266 = vcmask 392512
      %v267 = vsel %vm266, %v265, %v260
      %v268 = vadd.s32 %v228, 4294967248
      %v269 = vlaneseq
      %v270 = vshrl.u32 %v269, 7
      %v271 = vsub.s32 %v268, %v270
      %v272 = vrot.slane %v207, %v271
      %vm273 = vcmask 458112
      %v274 = vsel %vm273, %v272, %v267
      %v275 = vadd.s32 %v228, 4294967240
      %v276 = vlaneseq
      %v277 = vshrl.u32 %v276, 7
      %v278 = vsub.s32 %v275, %v277
      %v279 = vrot.slane %v210, %v278
      %vm280 = vcmask 523712
      %v281 = vsel %vm280, %v279, %v274
      %vm282 = vcmask 523264
      %v283 = vsel %vm282, %v281, 0
      %285 = vmatprep.subr.mxu0 0.0
      %286 = vmatpush1.msra.mxu0 %v211
      %287 = vmatprep.subr.mxu0 0.0
      %288 = vmatpush1.msra.mxu0 %v212
      %289 = vmatprep.subr.mxu0 0.0
      %290 = vmatpush1.msra.mxu0 %v213
      %291 = vmatprep.subr.mxu0 0.0
      %292 = vmatpush1.msra.mxu0 %v214
      %293 = vmatprep.subr.mxu0 0.0
      %294 = vmatpush1.msra.mxu0 %v215
      %295 = vmatprep.subr.mxu0 0.0
      %296 = vmatpush1.msra.mxu0 %v216
      %297 = vmatprep.subr.mxu0 0.0
      %298 = vmatpush1.msra.mxu0 %v217
      %299 = vmatprep.subr.mxu0 0.0
      %300 = vmatpush1.msra.mxu0 %v218
      %301 = vmatprep.subr.mxu0 0.0
      %302 = vmatpush1.msra.mxu0 0.0
      %303 = vmatprep.subr.mxu0 0.0
      %304 = vmatpush1.msra.mxu0 0.0
      %305 = vmatprep.subr.mxu0 0.0
      %306 = vmatpush1.msra.mxu0 0.0
      %307 = vmatprep.subr.mxu0 0.0
      %308 = vmatpush1.msra.mxu0 0.0
      %309 = vmatprep.subr.mxu0 0.0
      %310 = vmatpush1.msra.mxu0 0.0
      %311 = vmatprep.subr.mxu0 0.0
      %312 = vmatpush1.msra.mxu0 0.0
      %313 = vmatprep.subr.mxu0 0.0
      %314 = vmatpush1.msra.mxu0 0.0
      %315 = vmatprep.subr.mxu0 0.0
      %316 = vmatpush1.msra.mxu0 0.0
      %317 = vmatprep.subr.mxu0 0.0
      %318 = vmatpush1.msra.mxu0 0.0
      %319 = vmatprep.subr.mxu0 0.0
      %320 = vmatpush1.msra.mxu0 0.0
      %321 = vmatprep.subr.mxu0 0.0
      %322 = vmatpush1.msra.mxu0 0.0
      %323 = vmatprep.subr.mxu0 0.0
      %324 = vmatpush1.msra.mxu0 0.0
      %325 = vmatprep.subr.mxu0 0.0
      %326 = vmatpush1.msra.mxu0 0.0
      %327 = vmatprep.subr.mxu0 0.0
      %328 = vmatpush1.msra.mxu0 0.0
      %329 = vmatprep.subr.mxu0 0.0
      %330 = vmatpush1.msra.mxu0 0.0
      %331 = vmatprep.subr.mxu0 0.0
      %332 = vmatpush1.msra.mxu0 0.0
      %333 = vmatprep.subr.mxu0 0.0
      %334 = vmatpush1.msra.mxu0 0.0
      %335 = vmatprep.subr.mxu0 0.0
      %336 = vmatpush1.msra.mxu0 0.0
      %337 = vmatprep.subr.mxu0 0.0
      %338 = vmatpush1.msra.mxu0 0.0
      %339 = vmatprep.subr.mxu0 0.0
      %340 = vmatpush1.msra.mxu0 0.0
      %341 = vmatprep.subr.mxu0 0.0
      %342 = vmatpush1.msra.mxu0 0.0
      %343 = vmatprep.subr.mxu0 0.0
      %344 = vmatpush1.msra.mxu0 0.0
      %345 = vmatprep.subr.mxu0 0.0
      %346 = vmatpush1.msra.mxu0 0.0
      %347 = vmatprep.subr.mxu0 0.0
      %348 = vmatpush1.msra.mxu0 0.0
      %349 = vmatprep.mubr.f32.mxu0 0.0
      %350 = vmatmul.mubr.f32.gmra.mrb[0].mxu0 %v283
      %v351 = vpop.f32.mrb[0].mxu0
      %v352 = vadd.f32 0.0, %v351
      %v353 = vpop.f32.mrb[0].mxu0
      %354 = vdwg.mxu0
      %v355 = vmax.f32 %v352, 0.0
      %v356 = vld [vmem:[%s2] sm:$0xf]
      %vm357 = vcmask 31744
      %v359 = vsel %vm357, %v355, 0
      %vm361 = vcmask 1043456
      %v363 = vsel %vm361, %v356, 0
      %365 = vmatprep.subr.mxu0 0.0
      %366 = vmatpush1.msra.mxu0 %v363
      %367 = vmatprep.subr.mxu0 0.0
      %368 = vmatpush1.msra.mxu0 0.0
      %369 = vmatprep.subr.mxu0 0.0
      %370 = vmatpush1.msra.mxu0 0.0
      %371 = vmatprep.subr.mxu0 0.0
      %372 = vmatpush1.msra.mxu0 0.0
      %373 = vmatprep.subr.mxu0 0.0
      %374 = vmatpush1.msra.mxu0 0.0
      %375 = vmatprep.subr.mxu0 0.0
      %376 = vmatpush1.msra.mxu0 0.0
      %377 = vmatprep.subr.mxu0 0.0
      %378 = vmatpush1.msra.mxu0 0.0
      %379 = vmatprep.subr.mxu0 0.0
      %380 = vmatpush1.msra.mxu0 0.0
      %381 = vmatprep.subr.mxu0 0.0
      %382 = vmatpush1.msra.mxu0 0.0
      %383 = vmatprep.subr.mxu0 0.0
      %384 = vmatpush1.msra.mxu0 0.0
      %385 = vmatprep.subr.mxu0 0.0
      %386 = vmatpush1.msra.mxu0 0.0
      %387 = vmatprep.subr.mxu0 0.0
      %388 = vmatpush1.msra.mxu0 0.0
      %389 = vmatprep.subr.mxu0 0.0
      %390 = vmatpush1.msra.mxu0 0.0
      %391 = vmatprep.subr.mxu0 0.0
      %392 = vmatpush1.msra.mxu0 0.0
      %393 = vmatprep.subr.mxu0 0.0
      %394 = vmatpush1.msra.mxu0 0.0
      %395 = vmatprep.subr.mxu0 0.0
      %396 = vmatpush1.msra.mxu0 0.0
      %397 = vmatprep.subr.mxu0 0.0
      %398 = vmatpush1.msra.mxu0 0.0
      %399 = vmatprep.subr.mxu0 0.0
      %400 = vmatpush1.msra.mxu0 0.0
      %401 = vmatprep.subr.mxu0 0.0
      %402 = vmatpush1.msra.mxu0 0.0
      %403 = vmatprep.subr.mxu0 0.0
      %404 = vmatpush1.msra.mxu0 0.0
      %405 = vmatprep.subr.mxu0 0.0
      %406 = vmatpush1.msra.mxu0 0.0
      %407 = vmatprep.subr.mxu0 0.0
      %408 = vmatpush1.msra.mxu0 0.0
      %409 = vmatprep.subr.mxu0 0.0
      %410 = vmatpush1.msra.mxu0 0.0
      %411 = vmatprep.subr.mxu0 0.0
      %412 = vmatpush1.msra.mxu0 0.0
      %413 = vmatprep.subr.mxu0 0.0
      %414 = vmatpush1.msra.mxu0 0.0
      %415 = vmatprep.subr.mxu0 0.0
      %416 = vmatpush1.msra.mxu0 0.0
      %417 = vmatprep.subr.mxu0 0.0
      %418 = vmatpush1.msra.mxu0 0.0
      %419 = vmatprep.subr.mxu0 0.0
      %420 = vmatpush1.msra.mxu0 0.0
      %421 = vmatprep.subr.mxu0 0.0
      %422 = vmatpush1.msra.mxu0 0.0
      %423 = vmatprep.subr.mxu0 0.0
      %424 = vmatpush1.msra.mxu0 0.0
      %425 = vmatprep.subr.mxu0 0.0
      %426 = vmatpush1.msra.mxu0 0.0
      %427 = vmatprep.subr.mxu0 0.0
      %428 = vmatpush1.msra.mxu0 0.0
      %429 = vmatprep.mubr.f32.mxu0 0.0
      %430 = vmatmul.mubr.f32.gmra.mrb[0].mxu0 %v359
      %v431 = vpop.f32.mrb[0].mxu0
      %v432 = vadd.f32 0.0, %v431
      %v433 = vpop.f32.mrb[0].mxu0
      %434 = vdwg.mxu0
      %v435 = vxor.u32 %v432, 2147483648
      %v436 = vmul.f32 %v435, 1.442695
      %v437 = vpow.pop %v436
      %v438 = vadd.f32 %v437, 1.0
      %v439 = vrcp.pop %v438
      %v440 = vmul.f32 1.0, %v439
      %v441 = vlaneseq
      %v442 = vshrl.u32 %v441, 7
      %v443 = vsub.s32 0, %v442
      %v444 = vrot.slane %v440, %v443
      %446 = vbcast.lane.b32.xlu0 %v444, 256
      %v447 = vpop.permute.xlu0 %446
      %s449 = sor.u32 256, 8
      %450 = vbcast.lane.b32.xlu0 %v444, %s449
      %v451 = vpop.permute.xlu0 %450
      %s453 = sor.u32 256, 16
      %454 = vbcast.lane.b32.xlu0 %v444, %s453
      %v455 = vpop.permute.xlu0 %454
      %s457 = sor.u32 256, 24
      %458 = vbcast.lane.b32.xlu0 %v444, %s457
      %v459 = vpop.permute.xlu0 %458
      %s461 = sor.u32 256, 32
      %462 = vbcast.lane.b32.xlu0 %v444, %s461
      %v463 = vpop.permute.xlu0 %462
      %s465 = sor.u32 256, 40
      %466 = vbcast.lane.b32.xlu0 %v444, %s465
      %v467 = vpop.permute.xlu0 %466
      %s469 = sor.u32 256, 48
      %470 = vbcast.lane.b32.xlu0 %v444, %s469
      %v471 = vpop.permute.xlu0 %470
      %s473 = sor.u32 256, 56
      %474 = vbcast.lane.b32.xlu0 %v444, %s473
      %v475 = vpop.permute.xlu0 %474
      %v476 = vmul.f32 %v171, %v447
      %v477 = vmul.f32 %v172, %v447
      %v478 = vmul.f32 %v173, %v451
      %v479 = vmul.f32 %v174, %v451
      %v480 = vmul.f32 %v175, %v455
      %v481 = vmul.f32 %v176, %v455
      %v482 = vmul.f32 %v177, %v459
      %v483 = vmul.f32 %v178, %v459
      %v484 = vmul.f32 %v179, %v463
      %v485 = vmul.f32 %v180, %v463
      %v486 = vmul.f32 %v181, %v467
      %v487 = vmul.f32 %v182, %v467
      %v488 = vmul.f32 %v183, %v471
      %v489 = vmul.f32 %v184, %v471
      %v490 = vmul.f32 %v185, %v475
      %v491 = vmul.f32 %v186, %v475
      %492 = vst [vmem:[%s170] sm:$0xff] %v476
      %493 = vst [vmem:[%s170 + $0x8] sm:$0xff] %v477
      %494 = vst [vmem:[%s170 + $0x10] sm:$0xff] %v478
      %495 = vst [vmem:[%s170 + $0x18] sm:$0xff] %v479
      %496 = vst [vmem:[%s170 + $0x20] sm:$0xff] %v480
      %497 = vst [vmem:[%s170 + $0x28] sm:$0xff] %v481
      %498 = vst [vmem:[%s170 + $0x30] sm:$0xff] %v482
      %499 = vst [vmem:[%s170 + $0x38] sm:$0xff] %v483
      %500 = vst [vmem:[%s170 + $0x40] sm:$0xff] %v484
      %501 = vst [vmem:[%s170 + $0x48] sm:$0xff] %v485
      %502 = vst [vmem:[%s170 + $0x50] sm:$0xff] %v486
      %503 = vst [vmem:[%s170 + $0x58] sm:$0xff] %v487
      %504 = vst [vmem:[%s170 + $0x60] sm:$0xff] %v488
      %505 = vst [vmem:[%s170 + $0x68] sm:$0xff] %v489
      %506 = vst [vmem:[%s170 + $0x70] sm:$0xff] %v490
      %507 = vst [vmem:[%s170 + $0x78] sm:$0xff] %v491
      %p508 = scmp.lt.s32.totalorder %s14, 1
      %s509 = scalar_select %p508, %s14, 1
      %s510 = smul.addr %s509, 16
      %s511 = smul.addr %s510, 8
      %s512 = scalar_lea.vmem %s3, %s511
      // Predicated region
      $region33: #{se_attention.1} parent=31 // pred_check
        %p513 = pneg %p100
      $region34: #{se_attention.1} parent=31 // pred_check_branch
        %515 = sbr.rel (%p513) target = $region36
      $region35: #{se_attention.1} parent=31 // pred_region
        _
      $region36: #{se_attention.1} parent=31 // pred_fallthru
        _
    $region32: #{se_attention.1} parent=5 // pred_fallthru
      _
    %p516 = scmp.le.s32.totalorder 2, %s9
    // Predicated region
    $region37: #{se_attention.1} parent=5 // pred_check
      %p517 = pneg %p516
    $region38: #{se_attention.1} parent=5 // pred_check_branch
      %519 = sbr.rel (%p517) target = $region40
    $region39: #{se_attention.1} parent=5 // pred_region
      %s520 = ssub.s32 %s9, 2
      // Predicated region
      $region41: #{se_attention.1} parent=39 // pred_check
        %p521 = pneg %p106
      $region42: #{se_attention.1} parent=39 // pred_check_branch
        %523 = sbr.rel (%p521) target = $region44
      $region43: #{se_attention.1} parent=39 // pred_region
        %p524 = scmp.lt.s32.totalorder %s15, 1
        %s525 = scalar_select %p524, %s15, 1
        %s526 = smul.addr %s525, 16
        %s527 = smul.addr %s526, 8
        %s528 = scalar_lea.vmem %s3, %s527
      $region44: #{se_attention.1} parent=39 // pred_fallthru
        _
    $region40: #{se_attention.1} parent=5 // pred_fallthru
      _
  $region6: #{se_attention.1} parent=0 // loop_footer
    %s13 = sadd.s32 1, %s9
  $region7: #{se_attention.1} parent=0 // loop_footer_branch
    %8 = sbr.rel target = $region3
  $region8: #{se_attention.1} parent=0 // loop_exit
    _

</llo_original>
